<compile_context>
chip_gen: v5e
topology: v5e:2x2
jax: 0.10.0
libtpu: 0.0.40
codegen_flags: <defaults>
</compile_context>

<pallas_src>
import jax
import jax.numpy as jnp
from jax.experimental import pallas as pl
from jax.experimental.pallas import tpu as pltpu

D_IN = 15        # number_of_input_neurons
HIDDEN = 100     # number_of_hidden_neurons
OUT = 3          # number_of_output_neurons

D_PAD = 16       # D_IN + 1 bias lane (lane 15 carries constant 1.0)
H_PAD = 128      # HIDDEN padded to one full lane group
O_PAD = 128      # OUT padded for a lane-dense, unmasked output store
G3 = 3 * H_PAD   # fused gate width: [ i | o | g ], each in its own 128-lane slot

SLAB_ROWS = D_PAD + H_PAD   # 16 rows of gate weights+bias, 128 rows of fc weights+bias


def lstm_fused_kernel(x_ref, slab_ref, out_ref):
    """One LSTM-cell step (h0=c0=0) + Linear, fully fused, batched on M.

    x_ref:    (B_pad, D_PAD)  f32; lane 15 holds 1.0 (bias lane), rest padded input.
    slab_ref: (SLAB_ROWS, G3) bf16 parameter slab:
                rows 0:16   -> fused gate weights [i|o|g]; row 15 = b_ih + b_hh
                rows 16:144 -> fc weights in lanes 0:128; row 16+HIDDEN = b_fc
    out_ref:  (B_pad, O_PAD) f32
    """
    x = x_ref[...].astype(jnp.bfloat16)                        # (B, 16) bf16 for MXU

    # Fused gate matmul on the MXU (bias folded via the constant-1 lane).
    wg = slab_ref[0:D_PAD, :]                                  # (16, 384) bf16, zero-copy view
    gates = jnp.dot(x, wg, preferred_element_type=jnp.float32)  # (B, 384) f32

    # sigmoid(z) == 0.5*(1 + tanh(0.5*z)): a single EUP push per element, applied
    # only to the live i/o lanes; tanh only to the g slot.  All slices lane-aligned.
    io = gates[:, : 2 * H_PAD]                                 # i|o slots
    sg_io = 0.5 * (1.0 + jnp.tanh(0.5 * io))
    i_g = sg_io[:, :H_PAD]
    o_g = sg_io[:, H_PAD:]
    g_g = jnp.tanh(gates[:, 2 * H_PAD:])                       # g slot

    c1 = i_g * g_g                  # c0 == 0  =>  c1 = i * g   (f-gate term is dead)
    h1 = o_g * jnp.tanh(c1)         # padded lanes: 0.5 * tanh(0) == 0

    # Fold the fc bias: lane HIDDEN of h1 is exactly 0 here; set it to 1.0 so the
    # b_fc row of the fc weight block supplies the bias inside the matmul.
    lane = jax.lax.broadcasted_iota(jnp.int32, h1.shape, 1)
    h1 = h1 + (lane == HIDDEN).astype(jnp.float32)

    # dropout(out[:, -1, :]) is identity in eval mode.
    # TODO(synk): training-mode dropout (rate 0.25) via pltpu.prng_* not implemented.
    wfc = slab_ref[D_PAD:D_PAD + H_PAD, 0:O_PAD]               # (128, 128) bf16, zero-copy view
    y = jnp.dot(h1.astype(jnp.bfloat16), wfc,
                preferred_element_type=jnp.float32)            # (B, 128) f32
    out_ref[...] = y.astype(out_ref.dtype)


def init_params(key):
    """Deterministic synthetic init matching PyTorch parameter shapes/ranges."""
    keys = jax.random.split(key, 6)
    k = 1.0 / jnp.sqrt(jnp.float32(HIDDEN))
    return {
        "w_ih": jax.random.uniform(keys[0], (4 * HIDDEN, D_IN), jnp.float32, -k, k),
        "w_hh": jax.random.uniform(keys[1], (4 * HIDDEN, HIDDEN), jnp.float32, -k, k),
        "b_ih": jax.random.uniform(keys[2], (4 * HIDDEN,), jnp.float32, -k, k),
        "b_hh": jax.random.uniform(keys[3], (4 * HIDDEN,), jnp.float32, -k, k),
        "w_fc": jax.random.uniform(keys[4], (OUT, HIDDEN), jnp.float32, -k, k),
        "b_fc": jax.random.uniform(keys[5], (OUT,), jnp.float32, -k, k),
    }


def pack_params(params):
    """One-time repack of PyTorch-layout params into a single bf16 VMEM slab.

    W_hh is intentionally dropped and the f-gate slot removed: with seq_len==1
    and h0==c0==0 the recurrent term and f*c0 are exactly zero.
    """
    w_ih = params["w_ih"].reshape(4, HIDDEN, D_IN)               # PyTorch order: i, f, g, o
    b = (params["b_ih"] + params["b_hh"]).reshape(4, HIDDEN)

    slab = jnp.zeros((SLAB_ROWS, G3), jnp.float32)
    # Fused gate layout [ i | o | g ]; bias folded into row D_IN (the x bias lane).
    for slot, g in enumerate((0, 3, 2)):
        col = slot * H_PAD
        slab = slab.at[:D_IN, col:col + HIDDEN].set(w_ih[g].T)
        slab = slab.at[D_IN, col:col + HIDDEN].set(b[g])

    # fc weight block (zero padded rows/lanes); b_fc folded into the h1 bias-lane row.
    slab = slab.at[D_PAD:D_PAD + HIDDEN, :OUT].set(params["w_fc"].T)
    slab = slab.at[D_PAD + HIDDEN, :OUT].set(params["b_fc"])

    return jax.device_put(slab.astype(jnp.bfloat16))


def _pallas_forward(x_pad, slab):
    b_pad = x_pad.shape[0]
    return pl.pallas_call(
        lstm_fused_kernel,
        out_shape=jax.ShapeDtypeStruct((b_pad, O_PAD), jnp.float32),
        in_specs=[pl.BlockSpec(memory_space=pltpu.MemorySpace.VMEM),
                  pl.BlockSpec(memory_space=pltpu.MemorySpace.VMEM)],
        out_specs=pl.BlockSpec(memory_space=pltpu.MemorySpace.VMEM),
    )(x_pad, slab)


@jax.jit
def lstm_network_forward_batch(xs, slab):
    """Batched forward: xs (B, D_IN) -> (B, OUT); batch rides the matmul M dim."""
    b = xs.shape[0]
    b_pad = max(8, ((b + 7) // 8) * 8)
    # Append the constant-1 bias lane, pad batch rows; all fused into this one jit.
    x_aug = jnp.concatenate(
        [xs.astype(jnp.float32), jnp.ones((b, 1), jnp.float32)], axis=1)   # (B, 16)
    x_pad = jnp.zeros((b_pad, D_PAD), jnp.float32).at[:b, :].set(x_aug)
    out = _pallas_forward(x_pad, slab)
    return out[:b, :OUT]


def lstm_network_forward(x, slab):
    """Equivalent of LSTMNetwork.forward(x): x (D_IN,) vector -> (OUT,)."""
    return lstm_network_forward_batch(x.reshape(1, D_IN), slab)[0]


def _reference_forward(x, params):
    """Plain-JAX f32 reference (full LSTM-cell formula incl. zero h0/c0 terms)."""
    x2d = x.reshape(1, D_IN).astype(jnp.float32)
    h0 = jnp.zeros((1, HIDDEN), jnp.float32)
    c0 = jnp.zeros((1, HIDDEN), jnp.float32)
    gates = (x2d @ params["w_ih"].T + h0 @ params["w_hh"].T
             + params["b_ih"] + params["b_hh"])
    i_g, f_g, g_g, o_g = jnp.split(gates, 4, axis=-1)
    i_g = jax.nn.sigmoid(i_g)
    f_g = jax.nn.sigmoid(f_g)
    g_g = jnp.tanh(g_g)
    o_g = jax.nn.sigmoid(o_g)
    c1 = f_g * c0 + i_g * g_g
    h1 = o_g * jnp.tanh(c1)
    y = h1 @ params["w_fc"].T + params["b_fc"]
    return y.reshape(OUT)


if __name__ == "__main__":
    key = jax.random.PRNGKey(0)
    k_x, k_xb, k_p = jax.random.split(key, 3)
    params = init_params(k_p)
    slab = pack_params(params)          # one-time repack, outside the hot path

    # bf16 weights => loosened tolerance vs. the f32 reference (~few e-3 actual error).
    TOL = dict(atol=2e-2, rtol=2e-2)

    # Single-sample path (literal LSTMNetwork.forward semantics).
    x = jax.random.normal(k_x, (D_IN,), jnp.float32)
    out = jax.block_until_ready(lstm_network_forward(x, slab))
    ref = _reference_forward(x, params)
    assert out.shape == (OUT,), out.shape
    assert jnp.allclose(out, ref, **TOL), (out, ref)

    # Batched path (amortizes launch + weight DMA over the M dimension).
    B = 16
    xb = jax.random.normal(k_xb, (B, D_IN), jnp.float32)
    outb = jax.block_until_ready(lstm_network_forward_batch(xb, slab))
    refb = jnp.stack([_reference_forward(xb[i], params) for i in range(B)])
    assert outb.shape == (B, OUT), outb.shape
    assert jnp.allclose(outb, refb, **TOL), (outb, refb)

    print("KERNEL_OK")
</pallas_src>

<mosaic_0001>
module attributes {stable_mosaic.version = 11 : i64} {
  func.func @lstm_fused_kernel(%arg0: memref<8x16xf32, #tpu.memory_space<vmem>>, %arg1: memref<144x384xbf16, #tpu.memory_space<vmem>>, %arg2: memref<8x128xf32, #tpu.memory_space<vmem>>) attributes {dimension_semantics = [], scalar_prefetch = 0 : i64, scratch_operands = 0 : i64, tpu.core_type = #tpu.core_type<tc>} {
    %c0 = arith.constant 0 : index
    %c0_0 = arith.constant 0 : index
    %0 = vector.load %arg0[%c0, %c0_0] : memref<8x16xf32, #tpu.memory_space<vmem>>, vector<8x16xf32>
    %1 = arith.truncf %0 : vector<8x16xf32> to vector<8x16xbf16>
    %c0_1 = arith.constant 0 : index
    %c0_2 = arith.constant 0 : index
    %2 = vector.load %arg1[%c0_1, %c0_2] : memref<144x384xbf16, #tpu.memory_space<vmem>>, vector<16x384xbf16>
    %cst = arith.constant dense<0.000000e+00> : vector<8x384xf32>
    %3 = tpu.matmul %1, %2, %cst {dimension_numbers = #tpu.dot_dimension_numbers<[1], [0], [0], [1], [0, 0, 1, 1], [], []>} : vector<8x16xbf16>, vector<16x384xbf16>, vector<8x384xf32> -> vector<8x384xf32>
    %4 = vector.extract_strided_slice %3 {offsets = [0, 0], sizes = [8, 256], strides = [1, 1]} : vector<8x384xf32> to vector<8x256xf32>
    %cst_3 = arith.constant 5.000000e-01 : f32
    %5 = vector.broadcast %cst_3 : f32 to vector<8x256xf32>
    %6 = arith.mulf %5, %4 : vector<8x256xf32>
    %7 = math.tanh %6 : vector<8x256xf32>
    %cst_4 = arith.constant 1.000000e+00 : f32
    %8 = vector.broadcast %cst_4 : f32 to vector<8x256xf32>
    %9 = arith.addf %8, %7 : vector<8x256xf32>
    %cst_5 = arith.constant 5.000000e-01 : f32
    %10 = vector.broadcast %cst_5 : f32 to vector<8x256xf32>
    %11 = arith.mulf %10, %9 : vector<8x256xf32>
    %12 = vector.extract_strided_slice %11 {offsets = [0, 0], sizes = [8, 128], strides = [1, 1]} : vector<8x256xf32> to vector<8x128xf32>
    %13 = vector.extract_strided_slice %11 {offsets = [0, 128], sizes = [8, 128], strides = [1, 1]} : vector<8x256xf32> to vector<8x128xf32>
    %14 = vector.extract_strided_slice %3 {offsets = [0, 256], sizes = [8, 128], strides = [1, 1]} : vector<8x384xf32> to vector<8x128xf32>
    %15 = math.tanh %14 : vector<8x128xf32>
    %16 = arith.mulf %12, %15 : vector<8x128xf32>
    %17 = math.tanh %16 : vector<8x128xf32>
    %18 = arith.mulf %13, %17 : vector<8x128xf32>
    %19 = tpu.iota {dimensions = array<i32: 1>} : vector<8x128xi32>
    %c100_i32 = arith.constant 100 : i32
    %20 = vector.broadcast %c100_i32 : i32 to vector<8x128xi32>
    %21 = arith.cmpi eq, %19, %20 : vector<8x128xi32>
    %22 = arith.extui %21 : vector<8x128xi1> to vector<8x128xi32>
    %23 = arith.sitofp %22 : vector<8x128xi32> to vector<8x128xf32>
    %24 = arith.addf %18, %23 : vector<8x128xf32>
    %c16 = arith.constant 16 : index
    %c0_6 = arith.constant 0 : index
    %25 = vector.load %arg1[%c16, %c0_6] : memref<144x384xbf16, #tpu.memory_space<vmem>>, vector<128x128xbf16>
    %26 = arith.truncf %24 : vector<8x128xf32> to vector<8x128xbf16>
    %cst_7 = arith.constant dense<0.000000e+00> : vector<8x128xf32>
    %27 = tpu.matmul %26, %25, %cst_7 {dimension_numbers = #tpu.dot_dimension_numbers<[1], [0], [0], [1], [0, 0, 1, 1], [], []>} : vector<8x128xbf16>, vector<128x128xbf16>, vector<8x128xf32> -> vector<8x128xf32>
    %c0_8 = arith.constant 0 : index
    %c0_9 = arith.constant 0 : index
    %28 = vector.load %arg2[%c0_8, %c0_9] : memref<8x128xf32, #tpu.memory_space<vmem>>, vector<8x128xf32>
    tpu.vector_store %arg2[%c0_8, %c0_9], %27 {strides = array<i32>} : memref<8x128xf32, #tpu.memory_space<vmem>>, vector<8x128xf32>,
    return
  }
}

</mosaic_0001>

<llo_original>
// kernel: lstm_network_forward_batch.1
$region0: #{lstm_network_forward_batch.1}
  #allocation0 [shape = 'u32[]', space=smem, size = 0x4, offset = 0x4, fixed_abs, tag = 'smem constant byte address 0x4 - core index']
  #allocation1 [shape = 'u32[72,128]{1,0:T(1,128)}', space=vmem, size = 0x9000, scoped, tag = 'internal scratch']
  %s0 = inlined_call_operand.vmem [shape: f32[8,16], index: 0, kind: input, shape index: {}]
  %s1 = inlined_call_operand.hbm [shape: bf16[144,384], index: 1, kind: input, shape index: {}]
  %s2 = inlined_call_operand.vmem [shape: f32[8,128], index: 2, kind: output, shape index: {}]
  %s3 = sld [smem:[#allocation0]]
  $region22: #{lstm_network_forward_batch.1} parent=0
    _
  %s5 = ssub.s32 1, %s3
  %s6 = scalar_select 0, %s5, %s3
  $region1: #{lstm_network_forward_batch.1} parent=0
    #allocation2 [shape = 'u8[110592]{0}', space=vmem, size = 0x1b000, scoped, tag = 'input window, operand 1, single buffered']
    #allocation3 [shape = 's32[1]{0}', space=sflag, size = 0x4, scoped, tag = 'scoped memory for lstm_network_forward_batch.1']
    %7 = vsyncpa [#allocation3], 0
    // Predicated region
    $region2: #{lstm_network_forward_batch.1} parent=1 // pred_check
      _
    $region3: #{lstm_network_forward_batch.1} parent=1 // pred_check_branch
      %9 = sbr.rel (0) target = $region5
    $region4: #{lstm_network_forward_batch.1} parent=1 // pred_region
      _
    $region5: #{lstm_network_forward_batch.1} parent=1 // pred_fallthru
      _
    // Predicated region
    $region6: #{lstm_network_forward_batch.1} parent=1 // pred_check
      _
    $region7: #{lstm_network_forward_batch.1} parent=1 // pred_check_branch
      %11 = sbr.rel (0) target = $region9
    $region8: #{lstm_network_forward_batch.1} parent=1 // pred_region
      %13 = vsyncadd [#allocation3], 0
      %s14 = sshll.u32 %s1, 4
      %s15 = int_to_ptr.hbm [resolvable:$true] %s14
      %s16 = sshll.u32 [#allocation2], 4
      %s17 = int_to_ptr.vmem [resolvable:$true] %s16
      %22 = dma.hbm_to_vmem [thread:$0]  %s15, 3456, %s17, [#allocation3], 192, 192, 12
    $region9: #{lstm_network_forward_batch.1} parent=1 // pred_fallthru
      _
    // Predicated region
    $region10: #{lstm_network_forward_batch.1} parent=1 // pred_check
      _
    $region11: #{lstm_network_forward_batch.1} parent=1 // pred_check_branch
      %24 = sbr.rel (0) target = $region13
    $region12: #{lstm_network_forward_batch.1} parent=1 // pred_region
      %26 = dma.done [#allocation3], 3456
    $region13: #{lstm_network_forward_batch.1} parent=1 // pred_fallthru
      _
    %v28 = vld [vmem:[%s0] sm:$0xff]
    %v29 = vpack.c.bf16 %v28, %v28
    %v30 = vld [vmem:[#allocation2] sm:$0xff]
    %v31 = vld [vmem:[#allocation2 + $0x8] sm:$0xf]
    %v32 = vld [vmem:[#allocation2 + $0xc] sm:$0xff]
    %v33 = vld [vmem:[#allocation2 + $0x14] sm:$0xf]
    %v38 = vunpack.c.l.b16 %v30
    %v39 = vunpack.c.h.b16 %v30
    %v40 = vunpack.c.l.b16 %v31
    %v41 = vunpack.c.l.b16 %v32
    %v42 = vunpack.c.h.b16 %v32
    %v43 = vunpack.c.l.b16 %v33
    %v44 = vpack.c.b16 %v41, %v38
    %v45 = vpack.c.b16 %v42, %v39
    %v46 = vpack.c.b16 %v43, %v40
    %vm50 = vcmask 130048
    %v52 = vsel %vm50, %v29, 0
    %54 = vmatpush.bf16.msra.mxu0 0
    %55 = vmatpush.bf16.msra.mxu0 0
    %56 = vmatpush.bf16.msra.mxu0 0
    %57 = vmatpush.bf16.msra.mxu0 0
    %58 = vmatpush.bf16.msra.mxu0 0
    %59 = vmatpush.bf16.msra.mxu0 0
    %60 = vmatpush.bf16.msra.mxu0 0
    %61 = vmatpush.bf16.msra.mxu0 %v44
    %62 = vmatmul.bf16.gmra.mxu0 %v52
    %v63 = vpop.f32.mrf.mxu0
    %v64 = vadd.f32 0.0, %v63
    %v65 = vpop.f32.mrf.mxu0
    %66 = vdwg.mxu0
    %67 = vmatpush.bf16.msra.mxu0 0
    %68 = vmatpush.bf16.msra.mxu0 0
    %69 = vmatpush.bf16.msra.mxu0 0
    %70 = vmatpush.bf16.msra.mxu0 0
    %71 = vmatpush.bf16.msra.mxu0 0
    %72 = vmatpush.bf16.msra.mxu0 0
    %73 = vmatpush.bf16.msra.mxu0 0
    %74 = vmatpush.bf16.msra.mxu0 %v45
    %75 = vmatmul.bf16.gmra.mxu0 %v52
    %v76 = vpop.f32.mrf.mxu0
    %v77 = vadd.f32 0.0, %v76
    %v78 = vpop.f32.mrf.mxu0
    %79 = vdwg.mxu0
    %80 = vmatpush.bf16.msra.mxu0 0
    %81 = vmatpush.bf16.msra.mxu0 0
    %82 = vmatpush.bf16.msra.mxu0 0
    %83 = vmatpush.bf16.msra.mxu0 0
    %84 = vmatpush.bf16.msra.mxu0 0
    %85 = vmatpush.bf16.msra.mxu0 0
    %86 = vmatpush.bf16.msra.mxu0 0
    %87 = vmatpush.bf16.msra.mxu0 %v46
    %88 = vmatmul.bf16.gmra.mxu0 %v52
    %v89 = vpop.f32.mrf.mxu0
    %v90 = vadd.f32 0.0, %v89
    %v91 = vpop.f32.mrf.mxu0
    %92 = vdwg.mxu0
    %v93 = vmul.f32 %v64, 0.5
    %v94 = vmul.f32 %v77, 0.5
    %v95 = vtanh.pop %v93
    %v96 = vtanh.pop %v94
    %v97 = vadd.f32 %v95, 1.0
    %v98 = vadd.f32 %v96, 1.0
    %v99 = vmul.f32 %v97, 0.5
    %v100 = vmul.f32 %v98, 0.5
    %v101 = vtanh.pop %v90
    %v102 = vmul.f32 %v99, %v101
    %v103 = vtanh.pop %v102
    %v104 = vmul.f32 %v100, %v103
    %v105 = vlaneseq
    %v106 = vand.u32 %v105, 127
    %vm107 = vcmp.eq.s32.totalorder %v106, 100
    %v108 = vsel %vm107, 1, 0
    %v109 = vcvt.s32.f32 %v108
    %v110 = vadd.f32 %v104, %v109
    %v111 = vld [vmem:[#allocation2 + $0x18] sm:$0xf]
    %v112 = vld [vmem:[#allocation2 + $0x24] sm:$0xf]
    %v113 = vld [vmem:[#allocation2 + $0x30] sm:$0xf]
    %v114 = vld [vmem:[#allocation2 + $0x3c] sm:$0xf]
    %v115 = vld [vmem:[#allocation2 + $0x48] sm:$0xf]
    %v116 = vld [vmem:[#allocation2 + $0x54] sm:$0xf]
    %v117 = vld [vmem:[#allocation2 + $0x60] sm:$0xf]
    %v118 = vld [vmem:[#allocation2 + $0x6c] sm:$0xf]
    %v119 = vld [vmem:[#allocation2 + $0x78] sm:$0xf]
    %v120 = vld [vmem:[#allocation2 + $0x84] sm:$0xf]
    %v121 = vld [vmem:[#allocation2 + $0x90] sm:$0xf]
    %v122 = vld [vmem:[#allocation2 + $0x9c] sm:$0xf]
    %v123 = vld [vmem:[#allocation2 + $0xa8] sm:$0xf]
    %v124 = vld [vmem:[#allocation2 + $0xb4] sm:$0xf]
    %v125 = vld [vmem:[#allocation2 + $0xc0] sm:$0xf]
    %v126 = vld [vmem:[#allocation2 + $0xcc] sm:$0xf]
    %v127 = vpack.c.bf16 %v110, %v110
    %v144 = vunpack.c.l.b16 %v111
    %v145 = vunpack.c.l.b16 %v112
    %v146 = vunpack.c.l.b16 %v113
    %v147 = vunpack.c.l.b16 %v114
    %v148 = vunpack.c.l.b16 %v115
    %v149 = vunpack.c.l.b16 %v116
    %v150 = vunpack.c.l.b16 %v117
    %v151 = vunpack.c.l.b16 %v118
    %v152 = vunpack.c.l.b16 %v119
    %v153 = vunpack.c.l.b16 %v120
    %v154 = vunpack.c.l.b16 %v121
    %v155 = vunpack.c.l.b16 %v122
    %v156 = vunpack.c.l.b16 %v123
    %v157 = vunpack.c.l.b16 %v124
    %v158 = vunpack.c.l.b16 %v125
    %v159 = vunpack.c.l.b16 %v126
    %v160 = vpack.c.b16 %v145, %v144
    %v161 = vpack.c.b16 %v147, %v146
    %v162 = vpack.c.b16 %v149, %v148
    %v163 = vpack.c.b16 %v151, %v150
    %v164 = vpack.c.b16 %v153, %v152
    %v165 = vpack.c.b16 %v155, %v154
    %v166 = vpack.c.b16 %v157, %v156
    %v167 = vpack.c.b16 %v159, %v158
    %176 = vmatpush.bf16.msra.mxu0 %v167
    %177 = vmatpush.bf16.msra.mxu0 %v166
    %178 = vmatpush.bf16.msra.mxu0 %v165
    %179 = vmatpush.bf16.msra.mxu0 %v164
    %180 = vmatpush.bf16.msra.mxu0 %v163
    %181 = vmatpush.bf16.msra.mxu0 %v162
    %182 = vmatpush.bf16.msra.mxu0 %v161
    %183 = vmatpush.bf16.msra.mxu0 %v160
    %184 = vmatmul.bf16.gmra.mxu0 %v127
    %v185 = vpop.f32.mrf.mxu0
    %v186 = vadd.f32 0.0, %v185
    %v187 = vpop.f32.mrf.mxu0
    %188 = vdwg.mxu0
    %189 = vst [vmem:[%s2] sm:$0xff] %v186
    // Predicated region
    $region14: #{lstm_network_forward_batch.1} parent=1 // pred_check
      _
    $region15: #{lstm_network_forward_batch.1} parent=1 // pred_check_branch
      %191 = sbr.rel (0) target = $region17
    $region16: #{lstm_network_forward_batch.1} parent=1 // pred_region
      _
    $region17: #{lstm_network_forward_batch.1} parent=1 // pred_fallthru
      _
    // Predicated region
    $region18: #{lstm_network_forward_batch.1} parent=1 // pred_check
      _
    $region19: #{lstm_network_forward_batch.1} parent=1 // pred_check_branch
      %193 = sbr.rel (0) target = $region21
    $region20: #{lstm_network_forward_batch.1} parent=1 // pred_region
      _
    $region21: #{lstm_network_forward_batch.1} parent=1 // pred_fallthru
      _
    %194 = vsyncpa [#allocation3], 1

</llo_original>
